<compile_context>
chip_gen: v7x
topology: tpu7x:2x2x1
jax: 0.10.0
libtpu: 0.0.40
codegen_flags: <defaults>
</compile_context>

<pallas_src>
import functools

import jax
import jax.numpy as jnp
from jax.experimental import pallas as pl
from jax.experimental.pallas import tpu as pltpu

LANES = 128


def _ring_push_kernel(buf_ref, x_ref, out_ref, sem, *, slot_rows, num_slots):
    """HBM->HBM ring push.

    buf_ref: (B*rows, 128) HBM, x_ref: (rows, 128) HBM, out_ref: (B*rows, 128) HBM.
    """
    shift_rows = (num_slots - 1) * slot_rows

    # Shift: buf slots 1..B-1  ->  out slots 0..B-2 (one contiguous copy).
    shift_cp = pltpu.make_async_copy(
        buf_ref.at[pl.ds(slot_rows, shift_rows), :],
        out_ref.at[pl.ds(0, shift_rows), :],
        sem.at[0],
    )
    # Tail insert: x -> out slot B-1.
    tail_cp = pltpu.make_async_copy(
        x_ref,
        out_ref.at[pl.ds(shift_rows, slot_rows), :],
        sem.at[1],
    )

    shift_cp.start()
    tail_cp.start()
    shift_cp.wait()
    tail_cp.wait()


def _sublane_multiple(dtype) -> int:
    # f32 -> 8, bf16 -> 16, int8/fp8 -> 32 (keep row offsets tile-aligned).
    itemsize = jnp.dtype(dtype).itemsize
    return 8 * max(1, 4 // itemsize)


def image_buffer_forward(buffer: jax.Array, x: jax.Array) -> jax.Array:
    """Functional equivalent of ImageBufferSlow.forward (explicit state)."""
    assert buffer.shape[1:] == x.shape, "x must match a single buffer slot"
    assert buffer.dtype == x.dtype
    B = buffer.shape[0]
    itemsize = jnp.dtype(buffer.dtype).itemsize

    total = 1
    for d in x.shape:
        total *= d
    assert total % LANES == 0, "slot size must be a multiple of 128 lanes"
    rows = total // LANES
    sub = _sublane_multiple(buffer.dtype)
    assert rows % sub == 0, (
        f"rows ({rows}) must be a multiple of {sub} for {buffer.dtype}")

    if B == 1:
        # Degenerate ring buffer: the result is just the new image.
        return x.reshape(buffer.shape)

    buf_flat = buffer.reshape(B * rows, LANES)
    x_flat = x.reshape(rows, LANES)
    buf_bytes = B * rows * LANES * itemsize
    cost = pl.CostEstimate(flops=0, transcendentals=0,
                           bytes_accessed=2 * buf_bytes)

    out_flat = pl.pallas_call(
        functools.partial(_ring_push_kernel, slot_rows=rows, num_slots=B),
        out_shape=jax.ShapeDtypeStruct((B * rows, LANES), buffer.dtype),
        in_specs=[
            pl.BlockSpec(memory_space=pl.ANY),   # buffer stays in HBM
            pl.BlockSpec(memory_space=pl.ANY),   # x stays in HBM
        ],
        out_specs=pl.BlockSpec(memory_space=pl.ANY),
        scratch_shapes=[pltpu.SemaphoreType.DMA((2,))],
        cost_estimate=cost,
    )(buf_flat, x_flat)
    return out_flat.reshape(buffer.shape)


if __name__ == "__main__":
    # ImageBufferSlow(buffer_size=4, 2, 4, 16, 16): buffer starts as zeros.
    buffer_size = 4
    img_shape = (2, 4, 16, 16)

    key = jax.random.PRNGKey(0)
    buffer = jnp.zeros((buffer_size,) + img_shape, dtype=jnp.float32)

    keys = jax.random.split(key, 3)
    for k in keys:
        x = jax.random.normal(k, img_shape, dtype=jnp.float32)
        ref = jnp.concatenate([buffer[1:], x[None]], axis=0)

        out = image_buffer_forward(buffer, x)
        jax.block_until_ready(out)
        assert out.shape == buffer.shape and out.dtype == buffer.dtype
        assert jnp.allclose(out, ref), "ring-push mismatch vs. reference"

        buffer = out

    print("KERNEL_OK")
</pallas_src>

<mosaic_0001>
module attributes {stable_mosaic.version = 11 : i64} {
  func.func @_ring_push_kernel(%arg0: memref<64x128xf32, #tpu.memory_space<any>>, %arg1: memref<16x128xf32, #tpu.memory_space<any>>, %arg2: memref<64x128xf32, #tpu.memory_space<any>>, %arg3: memref<2x!tpu.dma_semaphore, #tpu.memory_space<semaphore_mem>>) attributes {dimension_semantics = [], scalar_prefetch = 0 : i64, scratch_operands = 1 : i64, tpu.core_type = #tpu.core_type<tc>} {
    %c0_i32 = arith.constant 0 : i32
    %c16_i32 = arith.constant 16 : i32
    %c0_i32_0 = arith.constant 0 : i32
    %0 = tpu.memref_slice %arg0[%c16_i32, %c0_i32_0] : memref<64x128xf32, #tpu.memory_space<any>> -> memref<48x128xf32, #tpu.memory_space<any>>
    %c0_i32_1 = arith.constant 0 : i32
    %c0_i32_2 = arith.constant 0 : i32
    %1 = tpu.memref_slice %arg2[%c0_i32_1, %c0_i32_2] : memref<64x128xf32, #tpu.memory_space<any>> -> memref<48x128xf32, #tpu.memory_space<any>>
    %2 = tpu.memref_slice %arg3[%c0_i32] : memref<2x!tpu.dma_semaphore, #tpu.memory_space<semaphore_mem>> -> memref<1x!tpu.dma_semaphore, #tpu.memory_space<semaphore_mem>>
    %3 = tpu.memref_squeeze %2 : memref<1x!tpu.dma_semaphore, #tpu.memory_space<semaphore_mem>> -> memref<!tpu.dma_semaphore, #tpu.memory_space<semaphore_mem>>
    tpu.enqueue_dma source(%0 : memref<48x128xf32, #tpu.memory_space<any>>) target(%1 : memref<48x128xf32, #tpu.memory_space<any>>) target_semaphore(%3 : memref<!tpu.dma_semaphore, #tpu.memory_space<semaphore_mem>>)
    %c1_i32 = arith.constant 1 : i32
    %c48_i32 = arith.constant 48 : i32
    %c0_i32_3 = arith.constant 0 : i32
    %4 = tpu.memref_slice %arg2[%c48_i32, %c0_i32_3] : memref<64x128xf32, #tpu.memory_space<any>> -> memref<16x128xf32, #tpu.memory_space<any>>
    %5 = tpu.memref_slice %arg3[%c1_i32] : memref<2x!tpu.dma_semaphore, #tpu.memory_space<semaphore_mem>> -> memref<1x!tpu.dma_semaphore, #tpu.memory_space<semaphore_mem>>
    %6 = tpu.memref_squeeze %5 : memref<1x!tpu.dma_semaphore, #tpu.memory_space<semaphore_mem>> -> memref<!tpu.dma_semaphore, #tpu.memory_space<semaphore_mem>>
    tpu.enqueue_dma source(%arg1 : memref<16x128xf32, #tpu.memory_space<any>>) target(%4 : memref<16x128xf32, #tpu.memory_space<any>>) target_semaphore(%6 : memref<!tpu.dma_semaphore, #tpu.memory_space<semaphore_mem>>)
    %c0_i32_4 = arith.constant 0 : i32
    %c16_i32_5 = arith.constant 16 : i32
    %c0_i32_6 = arith.constant 0 : i32
    %7 = tpu.memref_slice %arg0[%c16_i32_5, %c0_i32_6] : memref<64x128xf32, #tpu.memory_space<any>> -> memref<48x128xf32, #tpu.memory_space<any>>
    %c0_i32_7 = arith.constant 0 : i32
    %c0_i32_8 = arith.constant 0 : i32
    %8 = tpu.memref_slice %arg2[%c0_i32_7, %c0_i32_8] : memref<64x128xf32, #tpu.memory_space<any>> -> memref<48x128xf32, #tpu.memory_space<any>>
    %9 = tpu.memref_slice %arg3[%c0_i32_4] : memref<2x!tpu.dma_semaphore, #tpu.memory_space<semaphore_mem>> -> memref<1x!tpu.dma_semaphore, #tpu.memory_space<semaphore_mem>>
    %10 = tpu.memref_squeeze %9 : memref<1x!tpu.dma_semaphore, #tpu.memory_space<semaphore_mem>> -> memref<!tpu.dma_semaphore, #tpu.memory_space<semaphore_mem>>
    tpu.wait_dma2 semaphore(%10 : memref<!tpu.dma_semaphore, #tpu.memory_space<semaphore_mem>>) src(%7 : memref<48x128xf32, #tpu.memory_space<any>>) dst(%8 : memref<48x128xf32, #tpu.memory_space<any>>)
    %c1_i32_9 = arith.constant 1 : i32
    %c48_i32_10 = arith.constant 48 : i32
    %c0_i32_11 = arith.constant 0 : i32
    %11 = tpu.memref_slice %arg2[%c48_i32_10, %c0_i32_11] : memref<64x128xf32, #tpu.memory_space<any>> -> memref<16x128xf32, #tpu.memory_space<any>>
    %12 = tpu.memref_slice %arg3[%c1_i32_9] : memref<2x!tpu.dma_semaphore, #tpu.memory_space<semaphore_mem>> -> memref<1x!tpu.dma_semaphore, #tpu.memory_space<semaphore_mem>>
    %13 = tpu.memref_squeeze %12 : memref<1x!tpu.dma_semaphore, #tpu.memory_space<semaphore_mem>> -> memref<!tpu.dma_semaphore, #tpu.memory_space<semaphore_mem>>
    tpu.wait_dma2 semaphore(%13 : memref<!tpu.dma_semaphore, #tpu.memory_space<semaphore_mem>>) src(%arg1 : memref<16x128xf32, #tpu.memory_space<any>>) dst(%11 : memref<16x128xf32, #tpu.memory_space<any>>)
    return
  }
}

</mosaic_0001>

<llo_original>
// kernel: tpu_custom_call.1
$region0: #{tpu_custom_call.1}
  #allocation0 [shape = 'u32[]', space=smem, size = 0x4, offset = 0x4, fixed_abs, tag = 'smem constant byte address 0x4 - core index']
  #allocation1 [shape = 'u32[144,128]{1,0:T(1,128)}', space=vmem, size = 0x12000, scoped, tag = 'internal scratch']
  #allocation2 [shape = 's32[2]{0}', space=sflag, size = 0x8, scoped, tag = 'scratch operand']
  #allocation3 [shape = 's32[]', space=sflag, size = 0x4, offset = 0, fixed_abs, tag = 'sflag constant byte address 0x0 - dummy sync flag']
  #allocation4 [shape = 'u32[0]{0}', space=smem, size = 0, offset = 0, fixed_abs, tag = 'smem constant byte address 0x0 - null']
  #allocation5 [shape = 's32[]', space=sflag, size = 0x4, offset = 0, fixed_abs, tag = 'sflag constant byte address 0x0 - dummy sync flag']
  #allocation6 [shape = 'u32[0]{0}', space=smem, size = 0, offset = 0, fixed_abs, tag = 'smem constant byte address 0x0 - null']
  %s0 = inlined_call_operand.hbm [shape: f32[64,128], index: 0, kind: input, shape index: {}]
  %s1 = inlined_call_operand.hbm [shape: f32[16,128], index: 1, kind: input, shape index: {}]
  %s2 = inlined_call_operand.hbm [shape: f32[64,128], index: 2, kind: output, shape index: {}]
  %s3 = sld [smem:[#allocation0]]
  $region2: #{tpu_custom_call.1} parent=0
    _
  %s5 = ssub.s32 1, %s3
  %s6 = scalar_select 0, %s5, %s3
  %s7 = scalar_lea.hbm %s0, 256
  %s9 = sshll.u32 1, 14
  %s10 = sxor.u32 4294967295, %s9
  %s13 = sshll.u32 3, 24
  %s14 = sxor.u32 4294967295, %s13
  %s15 = sand.u32 0, %s14
  %s17 = sor.u32 %s15, 0
  %20 = dma.general %s7, 768, %s2, [#allocation2], [#allocation3], [#allocation4], %s17, 0
  %s21 = scalar_lea.hbm %s2, 768
  %s22 = scalar_lea.sflag [#allocation2], 1
  %s24 = sshll.u32 1, 14
  %s25 = sxor.u32 4294967295, %s24
  %s28 = sshll.u32 3, 24
  %s29 = sxor.u32 4294967295, %s28
  %s30 = sand.u32 0, %s29
  %s32 = sor.u32 %s30, 0
  %35 = dma.general %s1, 256, %s21, %s22, [#allocation5], [#allocation6], %s32, 0
  %s36 = smul.u32 48, 1
  %s37 = sshll.u32 %s36, 4
  %38 = dma.done [#allocation2], %s37
  %s39 = smul.u32 16, 1
  %s40 = sshll.u32 %s39, 4
  %41 = dma.done %s22, %s40
  %42 = vsyncmov [#allocation2]
  %s43 = vpop.sfrf %42
  %p44 = scmp.eq.s32.totalorder %s43, 0
  %p45 = pneg %p44
  %47 = shalt.err (%p45)
  %s48 = scalar_lea.sflag [#allocation2], 1
  %49 = vsyncmov %s48
  %s50 = vpop.sfrf %49
  %p51 = scmp.eq.s32.totalorder %s50, 0
  %p52 = pneg %p51
  %54 = shalt.err (%p52)

</llo_original>
